<compile_context>
chip_gen: v7x
topology: tpu7x:2x2x1
jax: 0.10.0
libtpu: 0.0.40
codegen_flags: <defaults>
</compile_context>

<pallas_src>
import jax
import jax.numpy as jnp
from jax.experimental import pallas as pl
from jax.experimental.pallas import tpu as pltpu


# ----------------------------------------------------------------------------
# Helpers
# ----------------------------------------------------------------------------
def _layernorm(x, w, b, eps=1e-5):
    mu = jnp.mean(x, axis=-1, keepdims=True)
    var = jnp.mean(jnp.square(x - mu), axis=-1, keepdims=True)
    return (x - mu) * jax.lax.rsqrt(var + eps) * w + b


def _row_tile(n, preferred=512):
    for t in (preferred, 256, 128, 64, 32, 16, 8):
        if t <= n and n % t == 0:
            return t
    return n


def _vmem_limit_bytes():
    """Generation-aware scoped-VMEM request: ~75% of physical VMEM, capped.
    v7x (64 MiB) -> ~48 MiB; v5e/v6e (128 MiB) -> ~96 MiB."""
    try:
        cap = int(getattr(pltpu.get_tpu_info(), "vmem_capacity_bytes", 0))
    except Exception:
        cap = 0
    if cap <= 0:
        cap = 64 * 1024 * 1024          # conservative fallback
    return min(int(cap * 3 // 4), 100 * 1024 * 1024)


def _pick_batch_block(B, S, D):
    """Largest divisor of B whose per-step activation footprint stays within a
    small budget, so stacked per-layer weights are fetched once per batch
    block rather than once per batch row."""
    per_row = S * D * 4 * 2 + S * 3 * D * 4 + 2 * S * 4 * D * 4   # rough bytes
    budget = 16 * 1024 * 1024
    bb = max(1, min(B, budget // max(per_row, 1)))
    while B % bb:
        bb -= 1
    return bb


# ----------------------------------------------------------------------------
# Simple tiled kernels (patch embed, LayerNorm, LN+projection, logits)
# ----------------------------------------------------------------------------
def linear_kernel(x_ref, w_ref, o_ref):
    o_ref[...] = jnp.dot(x_ref[...].astype(jnp.bfloat16), w_ref[...],
                         preferred_element_type=jnp.float32)


def pallas_linear(x, w):
    N, K = x.shape
    M = w.shape[1]
    t = _row_tile(N)
    return pl.pallas_call(
        linear_kernel,
        out_shape=jax.ShapeDtypeStruct((N, M), jnp.float32),
        grid=(N // t,),
        in_specs=[pl.BlockSpec((t, K), lambda i: (i, 0)),
                  pl.BlockSpec((K, M), lambda i: (0, 0))],
        out_specs=pl.BlockSpec((t, M), lambda i: (i, 0)),
        compiler_params=pltpu.CompilerParams(dimension_semantics=("parallel",)),
    )(x, w)


def layernorm_kernel(x_ref, w_ref, b_ref, o_ref):
    o_ref[...] = _layernorm(x_ref[...], w_ref[...], b_ref[...])


def pallas_layernorm(x2d, w, b):
    N, D = x2d.shape
    t = _row_tile(N)
    return pl.pallas_call(
        layernorm_kernel,
        out_shape=jax.ShapeDtypeStruct((N, D), jnp.float32),
        grid=(N // t,),
        in_specs=[pl.BlockSpec((t, D), lambda i: (i, 0)),
                  pl.BlockSpec((1, D), lambda i: (0, 0)),
                  pl.BlockSpec((1, D), lambda i: (0, 0))],
        out_specs=pl.BlockSpec((t, D), lambda i: (i, 0)),
        compiler_params=pltpu.CompilerParams(dimension_semantics=("parallel",)),
    )(x2d, w, b)


def ln_proj_kernel(x_ref, w_ref, b_ref, proj_ref, o_ref):
    h = _layernorm(x_ref[...], w_ref[...], b_ref[...]).astype(jnp.bfloat16)
    o_ref[...] = jnp.dot(h, proj_ref[...], preferred_element_type=jnp.float32)


def pallas_ln_proj(x2d, w, b, proj):
    N, D = x2d.shape
    E = proj.shape[1]
    t = _row_tile(N)
    return pl.pallas_call(
        ln_proj_kernel,
        out_shape=jax.ShapeDtypeStruct((N, E), jnp.float32),
        grid=(N // t,),
        in_specs=[pl.BlockSpec((t, D), lambda i: (i, 0)),
                  pl.BlockSpec((1, D), lambda i: (0, 0)),
                  pl.BlockSpec((1, D), lambda i: (0, 0)),
                  pl.BlockSpec((D, E), lambda i: (0, 0))],
        out_specs=pl.BlockSpec((t, E), lambda i: (i, 0)),
        compiler_params=pltpu.CompilerParams(dimension_semantics=("parallel",)),
    )(x2d, w, b, proj)


def clip_logits_kernel(scale_ref, img_ref, txt_ref, o_ref):
    img = img_ref[...]
    txt = txt_ref[...]
    # L2-normalise via rsqrt (EUP), no explicit transpose (NT dot_general).
    img = img * jax.lax.rsqrt(jnp.sum(img * img, axis=-1, keepdims=True))
    txt = txt * jax.lax.rsqrt(jnp.sum(txt * txt, axis=-1, keepdims=True))
    sim = jax.lax.dot_general(img, txt, (((1,), (1,)), ((), ())),
                              preferred_element_type=jnp.float32)
    o_ref[...] = scale_ref[0] * sim        # logit scale read from SMEM


# ----------------------------------------------------------------------------
# Fused transformer stack: all layers of one tower in a single pallas_call.
# Grid = (B // Bb, L); the (Bb, S, D) output block is the layer-resident
# activation accumulator (its index_map ignores the layer axis).
# ----------------------------------------------------------------------------
def make_stack_kernel(n_head, d_model, bb, causal):
    dh = d_model // n_head

    def kernel(x_ref, ln1w, ln1b, wqkv, bqkv, wo, bo,
               ln2w, ln2b, wfc, bfc, wpr, bpr, o_ref):
        l = pl.program_id(1)

        @pl.when(l == 0)
        def _():
            o_ref[...] = x_ref[...]        # seed resident accumulator once

        S = x_ref.shape[1]
        if causal:
            # build causal mask in-kernel: strict upper triangle disallowed
            row = jax.lax.broadcasted_iota(jnp.int32, (S, S), 0)
            col = jax.lax.broadcasted_iota(jnp.int32, (S, S), 1)
            allowed = col <= row

        w_qkv = wqkv[0]
        b_qkv = bqkv[0]
        w_o = wo[0]
        b_o = bo[0]
        w_fc = wfc[0]
        b_fc = bfc[0]
        w_pr = wpr[0]
        b_pr = bpr[0]
        g1w, g1b = ln1w[0], ln1b[0]
        g2w, g2b = ln2w[0], ln2b[0]

        # weights are fetched once per grid step; amortise over Bb sequences
        for r in range(bb):
            x = o_ref[r]                                   # (S, D) f32

            # ---------------- attention branch (pre-LN) ----------------
            h = _layernorm(x, g1w, g1b).astype(jnp.bfloat16)
            qkv = jnp.dot(h, w_qkv, preferred_element_type=jnp.float32) + b_qkv
            # NOTE: 1/sqrt(dh) already folded into the q columns of wqkv/bqkv.
            qkv_b = qkv.astype(jnp.bfloat16)

            heads = []
            for i in range(n_head):
                qi = qkv_b[:, i * dh:(i + 1) * dh]
                ki = qkv_b[:, d_model + i * dh:d_model + (i + 1) * dh]
                vi = qkv_b[:, 2 * d_model + i * dh:2 * d_model + (i + 1) * dh]
                # NT contraction: q @ k^T without materialising a transpose.
                s = jax.lax.dot_general(qi, ki, (((1,), (1,)), ((), ())),
                                        preferred_element_type=jnp.float32)
                if causal:
                    s = jnp.where(allowed, s, -jnp.inf)
                s = s - jnp.max(s, axis=-1, keepdims=True)
                p = jnp.exp(s)
                p = p * pl.reciprocal(jnp.sum(p, axis=-1, keepdims=True),
                                      approx=True)
                hv = jnp.dot(p.astype(jnp.bfloat16), vi,
                             preferred_element_type=jnp.float32)
                heads.append(hv.astype(jnp.bfloat16))      # bf16 before concat
            # concat heads -> ONE (S,D)@(D,D) output projection on the MXU.
            attn = jnp.concatenate(heads, axis=-1)
            attn = jnp.dot(attn, w_o, preferred_element_type=jnp.float32) + b_o
            x = x + attn

            # ---------------- MLP branch (pre-LN, QuickGELU) ----------------
            h2 = _layernorm(x, g2w, g2b).astype(jnp.bfloat16)
            h2 = jnp.dot(h2, w_fc, preferred_element_type=jnp.float32) + b_fc
            h2 = h2 * jax.nn.sigmoid(1.702 * h2)           # QuickGELU, f32 (v5e-safe)
            h2 = jnp.dot(h2.astype(jnp.bfloat16), w_pr,
                         preferred_element_type=jnp.float32) + b_pr

            o_ref[r] = x + h2                              # residual stream update

    return kernel


def residual_stack(x, stacked, n_head, *, causal):
    """Run all L ResidualAttentionBlocks in one pallas_call, grid=(B//Bb, L)."""
    B, S, D = x.shape
    L = stacked['ln1_w'].shape[0]
    bb = _pick_batch_block(B, S, D)
    kern = make_stack_kernel(n_head, D, bb, causal)

    names = ['ln1_w', 'ln1_b', 'wqkv', 'bqkv', 'wo', 'bo',
             'ln2_w', 'ln2_b', 'wfc', 'bfc', 'wpr', 'bpr']
    weights = [stacked[n] for n in names]

    def wspec(arr):
        nd = arr.ndim
        return pl.BlockSpec((1,) + arr.shape[1:],
                            lambda b, l, _nd=nd: (l,) + (0,) * (_nd - 1))

    in_specs = [pl.BlockSpec((bb, S, D), lambda b, l: (b, 0, 0))]
    in_specs += [wspec(w) for w in weights]

    # TODO(synk): for B==1 on v7x, also split the two towers across TensorCores
    # (core_map) — with a single parallel block one core idles.
    return pl.pallas_call(
        kern,
        out_shape=jax.ShapeDtypeStruct((B, S, D), jnp.float32),
        grid=(B // bb, L),
        in_specs=in_specs,
        out_specs=pl.BlockSpec((bb, S, D), lambda b, l: (b, 0, 0)),
        compiler_params=pltpu.CompilerParams(
            dimension_semantics=("parallel", "arbitrary"),
            vmem_limit_bytes=_vmem_limit_bytes()),
    )(x, *weights)


# ----------------------------------------------------------------------------
# Model pieces (glue in JAX, compute in Pallas)
# ----------------------------------------------------------------------------
def encode_image(image, p):
    # image: (B, 3, H, W) float32, NCHW
    B, C, H, W = image.shape
    ps = p['patch_size']
    Hp, Wp = H // ps, W // ps
    width = p['conv_w'].shape[1]

    # conv(kernel=stride=ps, no bias) == patch extraction + matmul
    patches = image.reshape(B, C, Hp, ps, Wp, ps)
    patches = patches.transpose(0, 2, 4, 1, 3, 5).reshape(B * Hp * Wp, C * ps * ps)
    x = pallas_linear(patches, p['conv_w']).reshape(B, Hp * Wp, width)

    # prepend cls token, add positional embedding
    cls = jnp.broadcast_to(p['cls_token'].reshape(1, 1, width), (B, 1, width))
    x = jnp.concatenate([cls, x], axis=1)
    x = x + p['pos_embed'][None]
    S = x.shape[1]

    # ln_pre
    x = pallas_layernorm(x.reshape(B * S, width),
                         p['ln_pre_w'], p['ln_pre_b']).reshape(B, S, width)

    # transformer stack (no attention mask for the vision tower)
    x = residual_stack(x, p['stack'], p['heads'], causal=False)

    # ln_post on cls token, then projection
    cls_out = x[:, 0, :]
    return pallas_ln_proj(cls_out, p['ln_post_w'], p['ln_post_b'], p['proj'])


def encode_text(tokens, p):
    # tokens: (B, S) int32
    B, S = tokens.shape
    width = p['tok_emb'].shape[1]

    # embedding gather + positional embedding (glue)
    x = jnp.take(p['tok_emb'], tokens, axis=0) + p['pos_embed'][None, :S]

    # causal mask is built inside the stack kernel (strict upper triangle).
    x = residual_stack(x, p['stack'], p['heads'], causal=True)

    # gather eos (argmax token id); LN is per-token so gather-then-LN == LN-then-gather
    eos_idx = jnp.argmax(tokens, axis=-1)
    feats = x[jnp.arange(B), eos_idx]

    return pallas_ln_proj(feats, p['ln_final_w'], p['ln_final_b'], p['proj'])


def clip_forward(image, text_tokens, params):
    # (the torch module also accepts pre-computed features; this implements
    #  the main image-tensor + long-token path)
    img_feat = encode_image(image, params['vision'])
    txt_feat = encode_text(text_tokens, params['text'])
    scale = jnp.exp(params['logit_scale']).reshape(1).astype(jnp.float32)
    logits_per_image = pl.pallas_call(
        clip_logits_kernel,
        out_shape=jax.ShapeDtypeStruct((img_feat.shape[0], txt_feat.shape[0]),
                                       jnp.float32),
        in_specs=[pl.BlockSpec(memory_space=pltpu.MemorySpace.SMEM),
                  pl.BlockSpec(memory_space=pltpu.MemorySpace.VMEM),
                  pl.BlockSpec(memory_space=pltpu.MemorySpace.VMEM)],
        out_specs=pl.BlockSpec(memory_space=pltpu.MemorySpace.VMEM),
    )(scale, img_feat, txt_feat)
    logits_per_text = logits_per_image.T
    return logits_per_image, logits_per_text


# ----------------------------------------------------------------------------
# Deterministic parameter initialisation (synthetic, mirrors module __init__)
# matmul weights are stored pre-transposed (in,out), stacked over layers, bf16.
# The 1/sqrt(dh) attention scale is folded into the q columns of wqkv/bqkv.
# ----------------------------------------------------------------------------
def init_clip_params(key, *, embed_dim, image_resolution, vision_layers,
                     vision_width, vision_patch_size, context_length,
                     vocab_size, text_layers, text_width, text_heads):
    keys = iter(jax.random.split(key, 256))

    def nrm(shape, std, dtype=jnp.float32):
        return (std * jax.random.normal(next(keys), shape, jnp.float32)).astype(dtype)

    def stack_params(width, layers, heads):
        attn_std = width ** -0.5
        proj_std = width ** -0.5 * (2 * layers) ** -0.5
        fc_std = (2 * width) ** -0.5
        L = layers
        dh = width // heads
        wqkv = attn_std * jax.random.normal(next(keys), (L, width, 3 * width),
                                            jnp.float32)
        # fold the attention scale into the q projection (bias is zero, so the
        # corresponding bias fold is a no-op).
        wqkv = wqkv.at[:, :, :width].multiply(dh ** -0.5)
        return dict(
            ln1_w=jnp.ones((L, 1, width), jnp.float32),
            ln1_b=jnp.zeros((L, 1, width), jnp.float32),
            wqkv=wqkv.astype(jnp.bfloat16),
            bqkv=jnp.zeros((L, 1, 3 * width), jnp.float32),
            wo=nrm((L, width, width), proj_std, jnp.bfloat16),
            bo=jnp.zeros((L, 1, width), jnp.float32),
            ln2_w=jnp.ones((L, 1, width), jnp.float32),
            ln2_b=jnp.zeros((L, 1, width), jnp.float32),
            wfc=nrm((L, width, 4 * width), fc_std, jnp.bfloat16),
            bfc=jnp.zeros((L, 1, 4 * width), jnp.float32),
            wpr=nrm((L, 4 * width, width), proj_std, jnp.bfloat16),
            bpr=jnp.zeros((L, 1, width), jnp.float32),
        )

    vision_heads = vision_width // 64
    n_patch = (image_resolution // vision_patch_size) ** 2
    sv = vision_width ** -0.5
    vision = dict(
        patch_size=vision_patch_size,
        heads=vision_heads,
        # conv weight (width,3,ps,ps) stored flattened+transposed: (3*ps*ps, width)
        conv_w=nrm((3 * vision_patch_size ** 2, vision_width), sv, jnp.bfloat16),
        cls_token=nrm((vision_width,), sv),
        pos_embed=nrm((n_patch + 1, vision_width), sv),
        ln_pre_w=jnp.ones((1, vision_width), jnp.float32),
        ln_pre_b=jnp.zeros((1, vision_width), jnp.float32),
        stack=stack_params(vision_width, vision_layers, vision_heads),
        ln_post_w=jnp.ones((1, vision_width), jnp.float32),
        ln_post_b=jnp.zeros((1, vision_width), jnp.float32),
        proj=nrm((vision_width, embed_dim), sv, jnp.bfloat16),
    )

    text = dict(
        heads=text_heads,
        tok_emb=nrm((vocab_size, text_width), 0.02),
        pos_embed=nrm((context_length, text_width), 0.01),
        stack=stack_params(text_width, text_layers, text_heads),
        ln_final_w=jnp.ones((1, text_width), jnp.float32),
        ln_final_b=jnp.zeros((1, text_width), jnp.float32),
        proj=nrm((text_width, embed_dim), text_width ** -0.5, jnp.bfloat16),
    )

    logit_scale = jnp.asarray(jnp.log(1.0 / 0.07), jnp.float32)
    return dict(vision=vision, text=text, logit_scale=logit_scale)


# ----------------------------------------------------------------------------
if __name__ == "__main__":
    cfg = dict(embed_dim=32, image_resolution=16, vision_layers=2,
               vision_width=64, vision_patch_size=8, context_length=8,
               vocab_size=50, text_layers=2, text_width=64, text_heads=2)

    key = jax.random.PRNGKey(0)
    kp, ki, kt = jax.random.split(key, 3)
    params = init_clip_params(kp, **cfg)

    image = jax.random.normal(ki, (2, 3, 16, 16), jnp.float32)          # NCHW
    text = jax.random.randint(kt, (2, 8), 0, cfg['vocab_size'], jnp.int32)

    logits_per_image, logits_per_text = clip_forward(image, text, params)
    jax.block_until_ready((logits_per_image, logits_per_text))

    assert logits_per_image.shape == (2, 2) and logits_per_text.shape == (2, 2)
    assert bool(jnp.all(jnp.isfinite(logits_per_image)))
    # TODO(synk): string tokenization (tokenize_text) has no Pallas equivalent.
    print("KERNEL_OK")
</pallas_src>

<mosaic_0001>
module attributes {stable_mosaic.version = 11 : i64} {
  func.func @linear_kernel(%arg0: i32, %arg1: memref<8x192xf32, #tpu.memory_space<vmem>>, %arg2: memref<192x64xbf16, #tpu.memory_space<vmem>>, %arg3: memref<8x64xf32, #tpu.memory_space<vmem>>) attributes {dimension_semantics = [#tpu.dimension_semantics<parallel>], iteration_bounds = array<i64: 1>, scalar_prefetch = 0 : i64, scratch_operands = 0 : i64, tpu.core_type = #tpu.core_type<tc>, window_params = [{transform_indices = @transform_0, window_bounds = array<i64: 8, 192>}, {pipeline_mode = #tpu.pipeline_mode<synchronous>, transform_indices = @transform_1, window_bounds = array<i64: 192, 64>}, {transform_indices = @transform_2, window_bounds = array<i64: 8, 64>}]} {
    %c0 = arith.constant 0 : index
    %c0_0 = arith.constant 0 : index
    %0 = vector.load %arg1[%c0, %c0_0] : memref<8x192xf32, #tpu.memory_space<vmem>>, vector<8x192xf32>
    %1 = arith.truncf %0 : vector<8x192xf32> to vector<8x192xbf16>
    %c0_1 = arith.constant 0 : index
    %c0_2 = arith.constant 0 : index
    %2 = vector.load %arg2[%c0_1, %c0_2] : memref<192x64xbf16, #tpu.memory_space<vmem>>, vector<192x64xbf16>
    %cst = arith.constant dense<0.000000e+00> : vector<8x64xf32>
    %3 = tpu.matmul %1, %2, %cst {dimension_numbers = #tpu.dot_dimension_numbers<[1], [0], [0], [1], [0, 0, 1, 1], [], []>} : vector<8x192xbf16>, vector<192x64xbf16>, vector<8x64xf32> -> vector<8x64xf32>
    %c0_3 = arith.constant 0 : index
    %c0_4 = arith.constant 0 : index
    %4 = vector.load %arg3[%c0_3, %c0_4] : memref<8x64xf32, #tpu.memory_space<vmem>>, vector<8x64xf32>
    tpu.vector_store %arg3[%c0_3, %c0_4], %3 {strides = array<i32>} : memref<8x64xf32, #tpu.memory_space<vmem>>, vector<8x64xf32>,
    return
  }
  func.func @transform_0(%arg0: i32) -> (i32, i32) {
    %c0_i32 = arith.constant 0 : i32
    %c0_i32_0 = arith.constant 0 : i32
    return %arg0, %c0_i32 : i32, i32
  }
  func.func @transform_1(%arg0: i32) -> (i32, i32) {
    %c0_i32 = arith.constant 0 : i32
    %c0_i32_0 = arith.constant 0 : i32
    %c0_i32_1 = arith.constant 0 : i32
    return %c0_i32, %c0_i32_0 : i32, i32
  }
  func.func @transform_2(%arg0: i32) -> (i32, i32) {
    %c0_i32 = arith.constant 0 : i32
    %c0_i32_0 = arith.constant 0 : i32
    return %arg0, %c0_i32 : i32, i32
  }
}

</mosaic_0001>

<llo_original>
// kernel: tpu_custom_call.1
$region0: #{tpu_custom_call.1}
  #allocation0 [shape = 'u32[]', space=smem, size = 0x4, offset = 0x4, fixed_abs, tag = 'smem constant byte address 0x4 - core index']
  #allocation1 [shape = 'u32[144,128]{1,0:T(1,128)}', space=vmem, size = 0x12000, scoped, tag = 'internal scratch']
  %s0 = inlined_call_operand.vmem [shape: f32[8,192], index: 0, kind: input, shape index: {}]
  %s1 = inlined_call_operand.vmem [shape: bf16[192,64], index: 1, kind: input, shape index: {}]
  %s2 = inlined_call_operand.hbm [shape: f32[8,64], index: 2, kind: output, shape index: {}]
  %s3 = sld [smem:[#allocation0]]
  $region18: #{tpu_custom_call.1} parent=0
    _
  %s5 = ssub.s32 1, %s3
  %s6 = scalar_select 0, %s5, %s3
  $region1: #{tpu_custom_call.1} parent=0
    #allocation2 [shape = 'u8[4096]{0}', space=vmem, size = 0x1000, scoped, tag = 'output window, operand 0, single buffered']
    #allocation3 [shape = 's32[1]{0}', space=sflag, size = 0x4, scoped, tag = 'scoped memory for tpu_custom_call.1']
    %7 = vsyncpa [#allocation3], 0
    // Predicated region
    $region2: #{tpu_custom_call.1} parent=1 // pred_check
      _
    $region3: #{tpu_custom_call.1} parent=1 // pred_check_branch
      %9 = sbr.rel (0) target = $region5
    $region4: #{tpu_custom_call.1} parent=1 // pred_region
      _
    $region5: #{tpu_custom_call.1} parent=1 // pred_fallthru
      _
    // Predicated region
    $region6: #{tpu_custom_call.1} parent=1 // pred_check
      _
    $region7: #{tpu_custom_call.1} parent=1 // pred_check_branch
      %11 = sbr.rel (0) target = $region9
    $region8: #{tpu_custom_call.1} parent=1 // pred_region
      _
    $region9: #{tpu_custom_call.1} parent=1 // pred_fallthru
      _
    %v13 = vld [vmem:[%s0] sm:$0xff]
    %v14 = vld [vmem:[%s0 + $0x8] sm:$0xff]
    %v15 = vpack.c.bf16 %v13, %v13
    %v16 = vpack.c.bf16 %v14, %v14
    %v17 = vld [vmem:[%s1] sm:$0xf]
    %v18 = vld [vmem:[%s1 + $0x4] sm:$0xf]
    %v19 = vld [vmem:[%s1 + $0x8] sm:$0xf]
    %v20 = vld [vmem:[%s1 + $0xc] sm:$0xf]
    %v21 = vld [vmem:[%s1 + $0x10] sm:$0xf]
    %v22 = vld [vmem:[%s1 + $0x14] sm:$0xf]
    %v23 = vld [vmem:[%s1 + $0x18] sm:$0xf]
    %v24 = vld [vmem:[%s1 + $0x1c] sm:$0xf]
    %v25 = vld [vmem:[%s1 + $0x20] sm:$0xf]
    %v26 = vld [vmem:[%s1 + $0x24] sm:$0xf]
    %v27 = vld [vmem:[%s1 + $0x28] sm:$0xf]
    %v28 = vld [vmem:[%s1 + $0x2c] sm:$0xf]
    %v29 = vld [vmem:[%s1 + $0x30] sm:$0xf]
    %v30 = vld [vmem:[%s1 + $0x34] sm:$0xf]
    %v31 = vld [vmem:[%s1 + $0x38] sm:$0xf]
    %v32 = vld [vmem:[%s1 + $0x3c] sm:$0xf]
    %v33 = vld [vmem:[%s1 + $0x40] sm:$0xf]
    %v34 = vld [vmem:[%s1 + $0x44] sm:$0xf]
    %v35 = vld [vmem:[%s1 + $0x48] sm:$0xf]
    %v36 = vld [vmem:[%s1 + $0x4c] sm:$0xf]
    %v37 = vld [vmem:[%s1 + $0x50] sm:$0xf]
    %v38 = vld [vmem:[%s1 + $0x54] sm:$0xf]
    %v39 = vld [vmem:[%s1 + $0x58] sm:$0xf]
    %v40 = vld [vmem:[%s1 + $0x5c] sm:$0xf]
    %v65 = vunpack.c.l.b16 %v17
    %v66 = vunpack.c.l.b16 %v18
    %v67 = vunpack.c.l.b16 %v19
    %v68 = vunpack.c.l.b16 %v20
    %v69 = vunpack.c.l.b16 %v21
    %v70 = vunpack.c.l.b16 %v22
    %v71 = vunpack.c.l.b16 %v23
    %v72 = vunpack.c.l.b16 %v24
    %v73 = vunpack.c.l.b16 %v25
    %v74 = vunpack.c.l.b16 %v26
    %v75 = vunpack.c.l.b16 %v27
    %v76 = vunpack.c.l.b16 %v28
    %v77 = vunpack.c.l.b16 %v29
    %v78 = vunpack.c.l.b16 %v30
    %v79 = vunpack.c.l.b16 %v31
    %v80 = vunpack.c.l.b16 %v32
    %v81 = vunpack.c.l.b16 %v33
    %v82 = vunpack.c.l.b16 %v34
    %v83 = vunpack.c.l.b16 %v35
    %v84 = vunpack.c.l.b16 %v36
    %v85 = vunpack.c.l.b16 %v37
    %v86 = vunpack.c.l.b16 %v38
    %v87 = vunpack.c.l.b16 %v39
    %v88 = vunpack.c.l.b16 %v40
    %v89 = vpack.c.b16 %v66, %v65
    %v90 = vpack.c.b16 %v68, %v67
    %v91 = vpack.c.b16 %v70, %v69
    %v92 = vpack.c.b16 %v72, %v71
    %v93 = vpack.c.b16 %v74, %v73
    %v94 = vpack.c.b16 %v76, %v75
    %v95 = vpack.c.b16 %v78, %v77
    %v96 = vpack.c.b16 %v80, %v79
    %v97 = vpack.c.b16 %v82, %v81
    %v98 = vpack.c.b16 %v84, %v83
    %v99 = vpack.c.b16 %v86, %v85
    %v100 = vpack.c.b16 %v88, %v87
    %vm113 = vcmask 523264
    %v115 = vsel %vm113, %v16, 0
    %117 = vmatprep.subr.bf16.mxu0 0
    %118 = vmatpush1.bf16.msra.mxu0 %v89
    %119 = vmatprep.subr.bf16.mxu0 0
    %120 = vmatpush1.bf16.msra.mxu0 %v90
    %121 = vmatprep.subr.bf16.mxu0 0
    %122 = vmatpush1.bf16.msra.mxu0 %v91
    %123 = vmatprep.subr.bf16.mxu0 0
    %124 = vmatpush1.bf16.msra.mxu0 %v92
    %125 = vmatprep.subr.bf16.mxu0 0
    %126 = vmatpush1.bf16.msra.mxu0 %v93
    %127 = vmatprep.subr.bf16.mxu0 0
    %128 = vmatpush1.bf16.msra.mxu0 %v94
    %129 = vmatprep.subr.bf16.mxu0 0
    %130 = vmatpush1.bf16.msra.mxu0 %v95
    %131 = vmatprep.subr.bf16.mxu0 0
    %132 = vmatpush1.bf16.msra.mxu0 %v96
    %133 = vmatprep.subr.bf16.mxu0 0
    %134 = vmatpush1.bf16.msra.mxu0 %v97
    %135 = vmatprep.subr.bf16.mxu0 0
    %136 = vmatpush1.bf16.msra.mxu0 %v98
    %137 = vmatprep.subr.bf16.mxu0 0
    %138 = vmatpush1.bf16.msra.mxu0 %v99
    %139 = vmatprep.subr.bf16.mxu0 0
    %140 = vmatpush1.bf16.msra.mxu0 %v100
    %141 = vmatprep.subr.bf16.mxu0 0
    %142 = vmatpush1.bf16.msra.mxu0 0
    %143 = vmatprep.subr.bf16.mxu0 0
    %144 = vmatpush1.bf16.msra.mxu0 0
    %145 = vmatprep.subr.bf16.mxu0 0
    %146 = vmatpush1.bf16.msra.mxu0 0
    %147 = vmatprep.subr.bf16.mxu0 0
    %148 = vmatpush1.bf16.msra.mxu0 0
    %149 = vmatprep.mubr.bf16.mxu0 %v115
    %150 = vmatmul.mubr.bf16.gmra.mrb[0].mxu0 %v15
    %v151 = vpop.f32.mrb[0].mxu0
    %v152 = vadd.f32 0.0, %v151
    %v153 = vpop.f32.mrb[0].mxu0
    %v154 = vpop.f32.mrb[0].mxu0
    %v155 = vpop.f32.mrb[0].mxu0
    %156 = vdwg.mxu0
    %157 = vst.msk [vmem:[#allocation2] sm:$0xff] %vm113, %v152
    // Predicated region
    $region10: #{tpu_custom_call.1} parent=1 // pred_check
      _
    $region11: #{tpu_custom_call.1} parent=1 // pred_check_branch
      %159 = sbr.rel (0) target = $region13
    $region12: #{tpu_custom_call.1} parent=1 // pred_region
      %s161 = ssub.s32 128, 128
      %162 = vsyncadd [#allocation3], %s161
      %s164 = sshll.u32 [#allocation2], 4
      %s165 = int_to_ptr.vmem [resolvable:$true] %s164
      %167 = dma.vmem_to_hbm [thread:$0]  %s165, 128, %s2, [#allocation3]
    $region13: #{tpu_custom_call.1} parent=1 // pred_fallthru
      _
    // Predicated region
    $region14: #{tpu_custom_call.1} parent=1 // pred_check
      _
    $region15: #{tpu_custom_call.1} parent=1 // pred_check_branch
      %169 = sbr.rel (0) target = $region17
    $region16: #{tpu_custom_call.1} parent=1 // pred_region
      %170 = dma.done [#allocation3], 128
    $region17: #{tpu_custom_call.1} parent=1 // pred_fallthru
      _
    %171 = vsyncpa [#allocation3], 1

</llo_original>
